<compile_context>
chip_gen: v6e
topology: v6e:2x2x1
jax: 0.10.0
libtpu: 0.0.40
codegen_flags: <defaults>
</compile_context>

<pallas_src>
import math

import jax
import jax.numpy as jnp
from jax.experimental import pallas as pl
from jax.experimental.pallas import tpu as pltpu

EPS = 1e-5
_VPU_CONV_MAX_CIN = 16  # Cin <= this: exact-f32 unrolled VPU MACs; else MXU matmul


def _vmem_cap_bytes():
    """~85% of physical VMEM (leave compiler headroom); safe fallback 64 MiB."""
    try:
        info = pltpu.get_tpu_info()
        cap = getattr(info, "vmem_capacity_bytes", None)
        if cap:
            return int(cap * 0.85)
    except Exception:
        pass
    return 64 * 1024 * 1024


def _make_kernel(C, hw_true, hw_pad):
    G = max(C // 4, 1)
    Cg = C // G
    assert C == G * Cg
    need_mask = hw_pad != hw_true
    inv_n = 1.0 / float(Cg * hw_true)

    def kernel(q_ref, k_ref,
               wq_ref, bq_ref, gq_ref, betaq_ref,
               wk_ref, bk_ref, gk_ref, betak_ref,
               gp_ref, betap_ref, wp_ref, bp_ref,
               out_ref):
        # q_ref/k_ref/out_ref blocks: (1, C, HW_pad) -- HW on the lane axis.
        if need_mask:
            lane = jax.lax.broadcasted_iota(jnp.int32, (1, hw_pad), 1)
            lane_mask = lane < hw_true
            masked = lambda t: jnp.where(lane_mask, t, 0.0)
        else:
            masked = lambda t: t

        # (C,1) -> (C,1): every channel gets its group's sum (groups are
        # contiguous channel blocks of size Cg).
        if Cg == 1:
            group_sum = lambda v: v
        elif G == 1:
            group_sum = lambda v: jnp.broadcast_to(
                jnp.sum(v, axis=0, keepdims=True), (C, 1))
        else:
            gid_r = jax.lax.broadcasted_iota(jnp.int32, (C, C), 0) // Cg
            gid_c = jax.lax.broadcasted_iota(jnp.int32, (C, C), 1) // Cg
            same_group = (gid_r == gid_c).astype(jnp.float32)  # (C, C) constant

            def group_sum(v):
                # hi/lo split keeps this tiny segment-sum matmul exact in f32
                # regardless of how the MXU evaluates f32 operands.
                v_hi = v.astype(jnp.bfloat16).astype(jnp.float32)
                v_lo = v - v_hi
                return (jnp.dot(same_group, v_hi, preferred_element_type=jnp.float32)
                        + jnp.dot(same_group, v_lo, preferred_element_type=jnp.float32))

        def conv1x1(x, w_ref, b_ref):
            # x: (Cin, HW_pad) f32; w: (Cout, Cin); b: (Cout, 1) -> (Cout, HW_pad)
            w = w_ref[...].astype(jnp.float32)
            b = b_ref[...].astype(jnp.float32)
            cout, cin = w.shape
            if cin <= _VPU_CONV_MAX_CIN:
                # Genuinely tiny Cin: exact f32 broadcast MACs on the VPU.
                acc = w[:, 0:1] * x[0:1, :] + b
                for i in range(1, cin):
                    acc = acc + w[:, i:i + 1] * x[i:i + 1, :]
                return acc
            # Mid/large Cin: f32 operands on the MXU, f32 accumulation.
            return jnp.dot(w, x, preferred_element_type=jnp.float32) + b

        def gn_scale_shift(x, gamma_ref, beta_ref):
            # Per-channel (scale, shift) such that GroupNorm(x) == x*scale + shift.
            gamma = gamma_ref[...].astype(jnp.float32)   # (C, 1)
            beta = beta_ref[...].astype(jnp.float32)     # (C, 1)
            s1 = jnp.sum(masked(x), axis=1, keepdims=True)        # (C,1) lane-reduce
            mu = group_sum(s1) * inv_n                            # (C,1)
            d = masked(x - mu)
            s2 = jnp.sum(d * d, axis=1, keepdims=True)            # (C,1) centered
            rstd = jax.lax.rsqrt(group_sum(s2) * inv_n + EPS)     # (C,1)
            scale = rstd * gamma
            shift = beta - mu * scale
            return scale, shift

        # ---- query path ----
        qc = conv1x1(q_ref[0].astype(jnp.float32), wq_ref, bq_ref)
        sq, hq = gn_scale_shift(qc, gq_ref, betaq_ref)
        q_feat = qc * sq + hq

        # ---- key path ----
        kc = conv1x1(k_ref[0].astype(jnp.float32), wk_ref, bk_ref)
        sk, hk = gn_scale_shift(kc, gk_ref, betak_ref)

        x = jax.nn.silu(q_feat + (kc * sk + hk))

        # ---- psi: third GroupNorm folded into the (C -> 1) conv ----
        #   psi = wp . (x*sp + hp) + bp = (wp*sp) . x + (wp . hp + bp)
        sp, hp = gn_scale_shift(x, gp_ref, betap_ref)
        wp = wp_ref[...].astype(jnp.float32)     # (C, 1)
        bp = bp_ref[...].astype(jnp.float32)     # (1, 1)
        weff = wp * sp                                                # (C, 1)
        cst = jnp.sum(wp * hp, axis=0, keepdims=True) + bp            # (1, 1)
        psi = jax.nn.silu(jnp.sum(weff * x, axis=0, keepdims=True) + cst)  # (1, HW_pad)

        # value = original key; re-read from the resident input block (no copy).
        out_ref[0] = (k_ref[0].astype(jnp.float32) * psi).astype(out_ref.dtype)

    return kernel


def cross_attention_pallas(query_nchw, key_nchw, params):
    """query/key: (N, C, H, W) float32.  Returns (N, C, H, W) float32."""
    N, C, H, W = query_nchw.shape
    G = max(C // 4, 1)
    if C % G != 0:
        raise ValueError(f"C={C} not divisible by groups={G} (GroupNorm constraint)")

    HW = H * W
    HW_pad = ((HW + 127) // 128) * 128   # lane-dense stores (unmasked vst)

    # NCHW -> (N, C, HW): metadata-only reshape, HW lands on the lane axis.
    q = query_nchw.reshape(N, C, HW)
    k = key_nchw.reshape(N, C, HW)
    if HW_pad != HW:
        pad = HW_pad - HW
        q = jnp.pad(q, ((0, 0), (0, 0), (0, pad)))
        k = jnp.pad(k, ((0, 0), (0, 0), (0, pad)))

    weights = (
        params["wq"], params["bq"], params["gq"], params["betaq"],
        params["wk"], params["bk"], params["gk"], params["betak"],
        params["gp"], params["betap"], params["wp"], params["bp"],
    )

    w_index = lambda n: (0, 0)            # all params 2-D, replicated over N
    in_specs = [
        pl.BlockSpec((1, C, HW_pad), lambda n: (n, 0, 0)),   # query
        pl.BlockSpec((1, C, HW_pad), lambda n: (n, 0, 0)),   # key (= value)
    ] + [pl.BlockSpec(w.shape, w_index) for w in weights]

    # VMEM budget: q/k/out double-buffered blocks + ~5 live f32 (C,HW) slabs
    # inside the kernel + params (x2 buffers) + headroom, capped below physical.
    slab_bytes = C * HW_pad * 4
    w_bytes = sum(int(w.size) * w.dtype.itemsize for w in weights)
    vmem_needed = (3 * 2 + 5) * slab_bytes + 2 * w_bytes + (2 << 20)
    vmem_limit = int(min(max(vmem_needed, 32 * 1024 * 1024), _vmem_cap_bytes()))
    # TODO(synk): if vmem_needed exceeds the cap, switch to the HW-tiled
    # two-pass GroupNorm path instead of relying on the clamp.

    out = pl.pallas_call(
        _make_kernel(C, HW, HW_pad),
        out_shape=jax.ShapeDtypeStruct((N, C, HW_pad), jnp.float32),
        grid=(N,),
        in_specs=in_specs,
        out_specs=pl.BlockSpec((1, C, HW_pad), lambda n: (n, 0, 0)),
        compiler_params=pltpu.CompilerParams(
            dimension_semantics=("parallel",),   # shard samples across TensorCores
            vmem_limit_bytes=vmem_limit,
        ),
    )(q, k, *weights)

    if HW_pad != HW:
        out = out[:, :, :HW]
    return out.reshape(N, C, H, W)


def init_params(key, C):
    """Deterministic init mirroring PyTorch defaults.

    Conv weights stored as (Cout, Cin) so the kernel computes W @ x + b.
    The psi conv weight is stored as (C, 1) so the kernel can fold the third
    GroupNorm into it and reduce over channels (sublanes) directly.
    GroupNorm: gamma=1, beta=0 (PyTorch default). Per-channel params are (C, 1)."""
    ks = jax.random.split(key, 6)
    bound = 1.0 / math.sqrt(C)

    def u(k, shape):
        return jax.random.uniform(k, shape, jnp.float32, -bound, bound)

    return {
        "wq": u(ks[0], (C, C)),
        "bq": u(ks[1], (C, 1)),
        "gq": jnp.ones((C, 1), jnp.float32),
        "betaq": jnp.zeros((C, 1), jnp.float32),
        "wk": u(ks[2], (C, C)),
        "bk": u(ks[3], (C, 1)),
        "gk": jnp.ones((C, 1), jnp.float32),
        "betak": jnp.zeros((C, 1), jnp.float32),
        "gp": jnp.ones((C, 1), jnp.float32),
        "betap": jnp.zeros((C, 1), jnp.float32),
        "wp": u(ks[4], (C, 1)),
        "bp": u(ks[5], (1, 1)),
    }


def _reference(query_nchw, key_nchw, params, groups):
    """Plain-JAX reference matching the PyTorch forward (for verification)."""
    N, C, H, W = query_nchw.shape

    def conv1x1(x, w, b):  # x: (N,C,H,W), w: (Cout,Cin), b: (Cout,1)
        y = jnp.einsum("nchw,oc->nohw", x, w, precision=jax.lax.Precision.HIGHEST)
        return y + b.reshape(1, -1, 1, 1)

    def gnorm(x, gamma, beta):
        xg = x.reshape(N, groups, C // groups, H, W)
        mean = xg.mean(axis=(2, 3, 4), keepdims=True)
        var = ((xg - mean) ** 2).mean(axis=(2, 3, 4), keepdims=True)
        xh = ((xg - mean) * jax.lax.rsqrt(var + EPS)).reshape(N, C, H, W)
        return xh * gamma.reshape(1, -1, 1, 1) + beta.reshape(1, -1, 1, 1)

    value = key_nchw
    kf = gnorm(conv1x1(key_nchw, params["wk"], params["bk"]), params["gk"], params["betak"])
    qf = gnorm(conv1x1(query_nchw, params["wq"], params["bq"]), params["gq"], params["betaq"])
    psi = jax.nn.silu(kf + qf)
    psi = gnorm(psi, params["gp"], params["betap"])
    psi = jax.nn.silu(conv1x1(psi, params["wp"].reshape(1, C), params["bp"]))  # (N,1,H,W)
    return value * psi


if __name__ == "__main__":
    root = jax.random.PRNGKey(0)
    k1, k2 = jax.random.split(root)

    # Case 1: tiny C (exact VPU conv path, single group), HW multiple of 128.
    N, C, H, W = 2, 4, 16, 16
    kq, kk, kp = jax.random.split(k1, 3)
    query = jax.random.normal(kq, (N, C, H, W), jnp.float32)
    key = jax.random.normal(kk, (N, C, H, W), jnp.float32)
    params = init_params(kp, C)
    out = jax.block_until_ready(cross_attention_pallas(query, key, params))
    ref = _reference(query, key, params, groups=max(C // 4, 1))
    assert out.shape == (N, C, H, W)
    assert jnp.allclose(out, ref, atol=1e-4, rtol=1e-4), "case 1 mismatch vs reference"

    # Case 2: multi-group GroupNorm (vectorized segment-sum path) and HW=64
    # (lane-padding + masked-stats path).
    N2, C2, H2, W2 = 1, 16, 8, 8
    kq2, kk2, kp2 = jax.random.split(k2, 3)
    query2 = jax.random.normal(kq2, (N2, C2, H2, W2), jnp.float32)
    key2 = jax.random.normal(kk2, (N2, C2, H2, W2), jnp.float32)
    params2 = init_params(kp2, C2)
    out2 = jax.block_until_ready(cross_attention_pallas(query2, key2, params2))
    ref2 = _reference(query2, key2, params2, groups=C2 // 4)
    assert jnp.allclose(out2, ref2, atol=1e-4, rtol=1e-4), "case 2 mismatch vs reference"

    print("KERNEL_OK")
</pallas_src>

<mosaic_0001>
module attributes {stable_mosaic.version = 11 : i64} {
  func.func @kernel(%arg0: i32, %arg1: memref<1x4x256xf32, #tpu.memory_space<vmem>>, %arg2: memref<1x4x256xf32, #tpu.memory_space<vmem>>, %arg3: memref<4x4xf32, #tpu.memory_space<vmem>>, %arg4: memref<4x1xf32, #tpu.memory_space<vmem>>, %arg5: memref<4x1xf32, #tpu.memory_space<vmem>>, %arg6: memref<4x1xf32, #tpu.memory_space<vmem>>, %arg7: memref<4x4xf32, #tpu.memory_space<vmem>>, %arg8: memref<4x1xf32, #tpu.memory_space<vmem>>, %arg9: memref<4x1xf32, #tpu.memory_space<vmem>>, %arg10: memref<4x1xf32, #tpu.memory_space<vmem>>, %arg11: memref<4x1xf32, #tpu.memory_space<vmem>>, %arg12: memref<4x1xf32, #tpu.memory_space<vmem>>, %arg13: memref<4x1xf32, #tpu.memory_space<vmem>>, %arg14: memref<1x1xf32, #tpu.memory_space<vmem>>, %arg15: memref<1x4x256xf32, #tpu.memory_space<vmem>>) attributes {dimension_semantics = [#tpu.dimension_semantics<parallel>], iteration_bounds = array<i64: 2>, scalar_prefetch = 0 : i64, scratch_operands = 0 : i64, tpu.core_type = #tpu.core_type<tc>, window_params = [{transform_indices = @transform_0, window_bounds = array<i64: 1, 4, 256>}, {transform_indices = @transform_1, window_bounds = array<i64: 1, 4, 256>}, {pipeline_mode = #tpu.pipeline_mode<synchronous>, transform_indices = @transform_2, window_bounds = array<i64: 4, 4>}, {pipeline_mode = #tpu.pipeline_mode<synchronous>, transform_indices = @transform_3, window_bounds = array<i64: 4, 1>}, {pipeline_mode = #tpu.pipeline_mode<synchronous>, transform_indices = @transform_4, window_bounds = array<i64: 4, 1>}, {pipeline_mode = #tpu.pipeline_mode<synchronous>, transform_indices = @transform_5, window_bounds = array<i64: 4, 1>}, {pipeline_mode = #tpu.pipeline_mode<synchronous>, transform_indices = @transform_6, window_bounds = array<i64: 4, 4>}, {pipeline_mode = #tpu.pipeline_mode<synchronous>, transform_indices = @transform_7, window_bounds = array<i64: 4, 1>}, {pipeline_mode = #tpu.pipeline_mode<synchronous>, transform_indices = @transform_8, window_bounds = array<i64: 4, 1>}, {pipeline_mode = #tpu.pipeline_mode<synchronous>, transform_indices = @transform_9, window_bounds = array<i64: 4, 1>}, {pipeline_mode = #tpu.pipeline_mode<synchronous>, transform_indices = @transform_10, window_bounds = array<i64: 4, 1>}, {pipeline_mode = #tpu.pipeline_mode<synchronous>, transform_indices = @transform_11, window_bounds = array<i64: 4, 1>}, {pipeline_mode = #tpu.pipeline_mode<synchronous>, transform_indices = @transform_12, window_bounds = array<i64: 4, 1>}, {pipeline_mode = #tpu.pipeline_mode<synchronous>, transform_indices = @transform_13, window_bounds = array<i64: 1, 1>}, {transform_indices = @transform_14, window_bounds = array<i64: 1, 4, 256>}]} {
    %c0 = arith.constant 0 : index
    %c0_0 = arith.constant 0 : index
    %c0_1 = arith.constant 0 : index
    %0 = vector.load %arg1[%c0, %c0_0, %c0_1] : memref<1x4x256xf32, #tpu.memory_space<vmem>>, vector<1x4x256xf32>
    %1 = vector.shape_cast %0 : vector<1x4x256xf32> to vector<4x256xf32>
    %c0_2 = arith.constant 0 : index
    %c0_3 = arith.constant 0 : index
    %2 = vector.load %arg3[%c0_2, %c0_3] : memref<4x4xf32, #tpu.memory_space<vmem>>, vector<4x4xf32>
    %c0_4 = arith.constant 0 : index
    %c0_5 = arith.constant 0 : index
    %3 = vector.load %arg4[%c0_4, %c0_5] : memref<4x1xf32, #tpu.memory_space<vmem>>, vector<4x1xf32>
    %4 = vector.extract_strided_slice %2 {offsets = [0, 0], sizes = [4, 1], strides = [1, 1]} : vector<4x4xf32> to vector<4x1xf32>
    %5 = vector.extract_strided_slice %1 {offsets = [0, 0], sizes = [1, 256], strides = [1, 1]} : vector<4x256xf32> to vector<1x256xf32>
    %6 = vector.broadcast %4 : vector<4x1xf32> to vector<4x256xf32>
    %7 = vector.broadcast %5 : vector<1x256xf32> to vector<4x256xf32>
    %8 = arith.mulf %6, %7 : vector<4x256xf32>
    %9 = vector.broadcast %3 : vector<4x1xf32> to vector<4x256xf32>
    %10 = arith.addf %8, %9 : vector<4x256xf32>
    %11 = vector.extract_strided_slice %2 {offsets = [0, 1], sizes = [4, 1], strides = [1, 1]} : vector<4x4xf32> to vector<4x1xf32>
    %12 = vector.extract_strided_slice %1 {offsets = [1, 0], sizes = [1, 256], strides = [1, 1]} : vector<4x256xf32> to vector<1x256xf32>
    %13 = vector.broadcast %11 : vector<4x1xf32> to vector<4x256xf32>
    %14 = vector.broadcast %12 : vector<1x256xf32> to vector<4x256xf32>
    %15 = arith.mulf %13, %14 : vector<4x256xf32>
    %16 = arith.addf %10, %15 : vector<4x256xf32>
    %17 = vector.extract_strided_slice %2 {offsets = [0, 2], sizes = [4, 1], strides = [1, 1]} : vector<4x4xf32> to vector<4x1xf32>
    %18 = vector.extract_strided_slice %1 {offsets = [2, 0], sizes = [1, 256], strides = [1, 1]} : vector<4x256xf32> to vector<1x256xf32>
    %19 = vector.broadcast %17 : vector<4x1xf32> to vector<4x256xf32>
    %20 = vector.broadcast %18 : vector<1x256xf32> to vector<4x256xf32>
    %21 = arith.mulf %19, %20 : vector<4x256xf32>
    %22 = arith.addf %16, %21 : vector<4x256xf32>
    %23 = vector.extract_strided_slice %2 {offsets = [0, 3], sizes = [4, 1], strides = [1, 1]} : vector<4x4xf32> to vector<4x1xf32>
    %24 = vector.extract_strided_slice %1 {offsets = [3, 0], sizes = [1, 256], strides = [1, 1]} : vector<4x256xf32> to vector<1x256xf32>
    %25 = vector.broadcast %23 : vector<4x1xf32> to vector<4x256xf32>
    %26 = vector.broadcast %24 : vector<1x256xf32> to vector<4x256xf32>
    %27 = arith.mulf %25, %26 : vector<4x256xf32>
    %28 = arith.addf %22, %27 : vector<4x256xf32>
    %c0_6 = arith.constant 0 : index
    %c0_7 = arith.constant 0 : index
    %29 = vector.load %arg5[%c0_6, %c0_7] : memref<4x1xf32, #tpu.memory_space<vmem>>, vector<4x1xf32>
    %c0_8 = arith.constant 0 : index
    %c0_9 = arith.constant 0 : index
    %30 = vector.load %arg6[%c0_8, %c0_9] : memref<4x1xf32, #tpu.memory_space<vmem>>, vector<4x1xf32>
    %cst = arith.constant dense<0.000000e+00> : vector<4xf32>
    %31 = vector.multi_reduction <add>, %28, %cst [1] : vector<4x256xf32> to vector<4xf32>
    %32 = vector.shape_cast %31 : vector<4xf32> to vector<4x1xf32>
    %cst_10 = arith.constant dense<0.000000e+00> : vector<1xf32>
    %33 = vector.multi_reduction <add>, %32, %cst_10 [0] : vector<4x1xf32> to vector<1xf32>
    %34 = vector.shape_cast %33 : vector<1xf32> to vector<1x1xf32>
    %35 = vector.shape_cast %34 : vector<1x1xf32> to vector<1x1xf32>
    %36 = vector.broadcast %35 : vector<1x1xf32> to vector<4x1xf32>
    %cst_11 = arith.constant 9.765625E-4 : f32
    %37 = vector.broadcast %cst_11 : f32 to vector<4x1xf32>
    %38 = arith.mulf %36, %37 : vector<4x1xf32>
    %39 = vector.broadcast %38 : vector<4x1xf32> to vector<4x256xf32>
    %40 = arith.subf %28, %39 : vector<4x256xf32>
    %41 = arith.mulf %40, %40 : vector<4x256xf32>
    %cst_12 = arith.constant dense<0.000000e+00> : vector<4xf32>
    %42 = vector.multi_reduction <add>, %41, %cst_12 [1] : vector<4x256xf32> to vector<4xf32>
    %43 = vector.shape_cast %42 : vector<4xf32> to vector<4x1xf32>
    %cst_13 = arith.constant dense<0.000000e+00> : vector<1xf32>
    %44 = vector.multi_reduction <add>, %43, %cst_13 [0] : vector<4x1xf32> to vector<1xf32>
    %45 = vector.shape_cast %44 : vector<1xf32> to vector<1x1xf32>
    %46 = vector.shape_cast %45 : vector<1x1xf32> to vector<1x1xf32>
    %47 = vector.broadcast %46 : vector<1x1xf32> to vector<4x1xf32>
    %cst_14 = arith.constant 9.765625E-4 : f32
    %48 = vector.broadcast %cst_14 : f32 to vector<4x1xf32>
    %49 = arith.mulf %47, %48 : vector<4x1xf32>
    %cst_15 = arith.constant 9.99999974E-6 : f32
    %50 = vector.broadcast %cst_15 : f32 to vector<4x1xf32>
    %51 = arith.addf %49, %50 : vector<4x1xf32>
    %52 = math.rsqrt %51 : vector<4x1xf32>
    %53 = arith.mulf %52, %29 : vector<4x1xf32>
    %54 = arith.mulf %38, %53 : vector<4x1xf32>
    %55 = arith.subf %30, %54 : vector<4x1xf32>
    %56 = vector.broadcast %53 : vector<4x1xf32> to vector<4x256xf32>
    %57 = arith.mulf %28, %56 : vector<4x256xf32>
    %58 = vector.broadcast %55 : vector<4x1xf32> to vector<4x256xf32>
    %59 = arith.addf %57, %58 : vector<4x256xf32>
    %c0_16 = arith.constant 0 : index
    %c0_17 = arith.constant 0 : index
    %c0_18 = arith.constant 0 : index
    %60 = vector.load %arg2[%c0_16, %c0_17, %c0_18] : memref<1x4x256xf32, #tpu.memory_space<vmem>>, vector<1x4x256xf32>
    %61 = vector.shape_cast %60 : vector<1x4x256xf32> to vector<4x256xf32>
    %c0_19 = arith.constant 0 : index
    %c0_20 = arith.constant 0 : index
    %62 = vector.load %arg7[%c0_19, %c0_20] : memref<4x4xf32, #tpu.memory_space<vmem>>, vector<4x4xf32>
    %c0_21 = arith.constant 0 : index
    %c0_22 = arith.constant 0 : index
    %63 = vector.load %arg8[%c0_21, %c0_22] : memref<4x1xf32, #tpu.memory_space<vmem>>, vector<4x1xf32>
    %64 = vector.extract_strided_slice %62 {offsets = [0, 0], sizes = [4, 1], strides = [1, 1]} : vector<4x4xf32> to vector<4x1xf32>
    %65 = vector.extract_strided_slice %61 {offsets = [0, 0], sizes = [1, 256], strides = [1, 1]} : vector<4x256xf32> to vector<1x256xf32>
    %66 = vector.broadcast %64 : vector<4x1xf32> to vector<4x256xf32>
    %67 = vector.broadcast %65 : vector<1x256xf32> to vector<4x256xf32>
    %68 = arith.mulf %66, %67 : vector<4x256xf32>
    %69 = vector.broadcast %63 : vector<4x1xf32> to vector<4x256xf32>
    %70 = arith.addf %68, %69 : vector<4x256xf32>
    %71 = vector.extract_strided_slice %62 {offsets = [0, 1], sizes = [4, 1], strides = [1, 1]} : vector<4x4xf32> to vector<4x1xf32>
    %72 = vector.extract_strided_slice %61 {offsets = [1, 0], sizes = [1, 256], strides = [1, 1]} : vector<4x256xf32> to vector<1x256xf32>
    %73 = vector.broadcast %71 : vector<4x1xf32> to vector<4x256xf32>
    %74 = vector.broadcast %72 : vector<1x256xf32> to vector<4x256xf32>
    %75 = arith.mulf %73, %74 : vector<4x256xf32>
    %76 = arith.addf %70, %75 : vector<4x256xf32>
    %77 = vector.extract_strided_slice %62 {offsets = [0, 2], sizes = [4, 1], strides = [1, 1]} : vector<4x4xf32> to vector<4x1xf32>
    %78 = vector.extract_strided_slice %61 {offsets = [2, 0], sizes = [1, 256], strides = [1, 1]} : vector<4x256xf32> to vector<1x256xf32>
    %79 = vector.broadcast %77 : vector<4x1xf32> to vector<4x256xf32>
    %80 = vector.broadcast %78 : vector<1x256xf32> to vector<4x256xf32>
    %81 = arith.mulf %79, %80 : vector<4x256xf32>
    %82 = arith.addf %76, %81 : vector<4x256xf32>
    %83 = vector.extract_strided_slice %62 {offsets = [0, 3], sizes = [4, 1], strides = [1, 1]} : vector<4x4xf32> to vector<4x1xf32>
    %84 = vector.extract_strided_slice %61 {offsets = [3, 0], sizes = [1, 256], strides = [1, 1]} : vector<4x256xf32> to vector<1x256xf32>
    %85 = vector.broadcast %83 : vector<4x1xf32> to vector<4x256xf32>
    %86 = vector.broadcast %84 : vector<1x256xf32> to vector<4x256xf32>
    %87 = arith.mulf %85, %86 : vector<4x256xf32>
    %88 = arith.addf %82, %87 : vector<4x256xf32>
    %c0_23 = arith.constant 0 : index
    %c0_24 = arith.constant 0 : index
    %89 = vector.load %arg9[%c0_23, %c0_24] : memref<4x1xf32, #tpu.memory_space<vmem>>, vector<4x1xf32>
    %c0_25 = arith.constant 0 : index
    %c0_26 = arith.constant 0 : index
    %90 = vector.load %arg10[%c0_25, %c0_26] : memref<4x1xf32, #tpu.memory_space<vmem>>, vector<4x1xf32>
    %cst_27 = arith.constant dense<0.000000e+00> : vector<4xf32>
    %91 = vector.multi_reduction <add>, %88, %cst_27 [1] : vector<4x256xf32> to vector<4xf32>
    %92 = vector.shape_cast %91 : vector<4xf32> to vector<4x1xf32>
    %cst_28 = arith.constant dense<0.000000e+00> : vector<1xf32>
    %93 = vector.multi_reduction <add>, %92, %cst_28 [0] : vector<4x1xf32> to vector<1xf32>
    %94 = vector.shape_cast %93 : vector<1xf32> to vector<1x1xf32>
    %95 = vector.shape_cast %94 : vector<1x1xf32> to vector<1x1xf32>
    %96 = vector.broadcast %95 : vector<1x1xf32> to vector<4x1xf32>
    %cst_29 = arith.constant 9.765625E-4 : f32
    %97 = vector.broadcast %cst_29 : f32 to vector<4x1xf32>
    %98 = arith.mulf %96, %97 : vector<4x1xf32>
    %99 = vector.broadcast %98 : vector<4x1xf32> to vector<4x256xf32>
    %100 = arith.subf %88, %99 : vector<4x256xf32>
    %101 = arith.mulf %100, %100 : vector<4x256xf32>
    %cst_30 = arith.constant dense<0.000000e+00> : vector<4xf32>
    %102 = vector.multi_reduction <add>, %101, %cst_30 [1] : vector<4x256xf32> to vector<4xf32>
    %103 = vector.shape_cast %102 : vector<4xf32> to vector<4x1xf32>
    %cst_31 = arith.constant dense<0.000000e+00> : vector<1xf32>
    %104 = vector.multi_reduction <add>, %103, %cst_31 [0] : vector<4x1xf32> to vector<1xf32>
    %105 = vector.shape_cast %104 : vector<1xf32> to vector<1x1xf32>
    %106 = vector.shape_cast %105 : vector<1x1xf32> to vector<1x1xf32>
    %107 = vector.broadcast %106 : vector<1x1xf32> to vector<4x1xf32>
    %cst_32 = arith.constant 9.765625E-4 : f32
    %108 = vector.broadcast %cst_32 : f32 to vector<4x1xf32>
    %109 = arith.mulf %107, %108 : vector<4x1xf32>
    %cst_33 = arith.constant 9.99999974E-6 : f32
    %110 = vector.broadcast %cst_33 : f32 to vector<4x1xf32>
    %111 = arith.addf %109, %110 : vector<4x1xf32>
    %112 = math.rsqrt %111 : vector<4x1xf32>
    %113 = arith.mulf %112, %89 : vector<4x1xf32>
    %114 = arith.mulf %98, %113 : vector<4x1xf32>
    %115 = arith.subf %90, %114 : vector<4x1xf32>
    %116 = vector.broadcast %113 : vector<4x1xf32> to vector<4x256xf32>
    %117 = arith.mulf %88, %116 : vector<4x256xf32>
    %118 = vector.broadcast %115 : vector<4x1xf32> to vector<4x256xf32>
    %119 = arith.addf %117, %118 : vector<4x256xf32>
    %120 = arith.addf %59, %119 : vector<4x256xf32>
    %121 = arith.negf %120 : vector<4x256xf32>
    %122 = math.exp %121 : vector<4x256xf32>
    %cst_34 = arith.constant 1.000000e+00 : f32
    %123 = vector.broadcast %cst_34 : f32 to vector<4x256xf32>
    %124 = arith.addf %123, %122 : vector<4x256xf32>
    %125 = arith.divf %123, %124 : vector<4x256xf32>
    %126 = arith.mulf %120, %125 : vector<4x256xf32>
    %c0_35 = arith.constant 0 : index
    %c0_36 = arith.constant 0 : index
    %127 = vector.load %arg11[%c0_35, %c0_36] : memref<4x1xf32, #tpu.memory_space<vmem>>, vector<4x1xf32>
    %c0_37 = arith.constant 0 : index
    %c0_38 = arith.constant 0 : index
    %128 = vector.load %arg12[%c0_37, %c0_38] : memref<4x1xf32, #tpu.memory_space<vmem>>, vector<4x1xf32>
    %cst_39 = arith.constant dense<0.000000e+00> : vector<4xf32>
    %129 = vector.multi_reduction <add>, %126, %cst_39 [1] : vector<4x256xf32> to vector<4xf32>
    %130 = vector.shape_cast %129 : vector<4xf32> to vector<4x1xf32>
    %cst_40 = arith.constant dense<0.000000e+00> : vector<1xf32>
    %131 = vector.multi_reduction <add>, %130, %cst_40 [0] : vector<4x1xf32> to vector<1xf32>
    %132 = vector.shape_cast %131 : vector<1xf32> to vector<1x1xf32>
    %133 = vector.shape_cast %132 : vector<1x1xf32> to vector<1x1xf32>
    %134 = vector.broadcast %133 : vector<1x1xf32> to vector<4x1xf32>
    %cst_41 = arith.constant 9.765625E-4 : f32
    %135 = vector.broadcast %cst_41 : f32 to vector<4x1xf32>
    %136 = arith.mulf %134, %135 : vector<4x1xf32>
    %137 = vector.broadcast %136 : vector<4x1xf32> to vector<4x256xf32>
    %138 = arith.subf %126, %137 : vector<4x256xf32>
    %139 = arith.mulf %138, %138 : vector<4x256xf32>
    %cst_42 = arith.constant dense<0.000000e+00> : vector<4xf32>
    %140 = vector.multi_reduction <add>, %139, %cst_42 [1] : vector<4x256xf32> to vector<4xf32>
    %141 = vector.shape_cast %140 : vector<4xf32> to vector<4x1xf32>
    %cst_43 = arith.constant dense<0.000000e+00> : vector<1xf32>
    %142 = vector.multi_reduction <add>, %141, %cst_43 [0] : vector<4x1xf32> to vector<1xf32>
    %143 = vector.shape_cast %142 : vector<1xf32> to vector<1x1xf32>
    %144 = vector.shape_cast %143 : vector<1x1xf32> to vector<1x1xf32>
    %145 = vector.broadcast %144 : vector<1x1xf32> to vector<4x1xf32>
    %cst_44 = arith.constant 9.765625E-4 : f32
    %146 = vector.broadcast %cst_44 : f32 to vector<4x1xf32>
    %147 = arith.mulf %145, %146 : vector<4x1xf32>
    %cst_45 = arith.constant 9.99999974E-6 : f32
    %148 = vector.broadcast %cst_45 : f32 to vector<4x1xf32>
    %149 = arith.addf %147, %148 : vector<4x1xf32>
    %150 = math.rsqrt %149 : vector<4x1xf32>
    %151 = arith.mulf %150, %127 : vector<4x1xf32>
    %152 = arith.mulf %136, %151 : vector<4x1xf32>
    %153 = arith.subf %128, %152 : vector<4x1xf32>
    %c0_46 = arith.constant 0 : index
    %c0_47 = arith.constant 0 : index
    %154 = vector.load %arg13[%c0_46, %c0_47] : memref<4x1xf32, #tpu.memory_space<vmem>>, vector<4x1xf32>
    %c0_48 = arith.constant 0 : index
    %c0_49 = arith.constant 0 : index
    %155 = vector.load %arg14[%c0_48, %c0_49] : memref<1x1xf32, #tpu.memory_space<vmem>>, vector<1x1xf32>
    %156 = arith.mulf %154, %151 : vector<4x1xf32>
    %157 = arith.mulf %154, %153 : vector<4x1xf32>
    %cst_50 = arith.constant dense<0.000000e+00> : vector<1xf32>
    %158 = vector.multi_reduction <add>, %157, %cst_50 [0] : vector<4x1xf32> to vector<1xf32>
    %159 = vector.shape_cast %158 : vector<1xf32> to vector<1x1xf32>
    %160 = arith.addf %159, %155 : vector<1x1xf32>
    %161 = vector.broadcast %156 : vector<4x1xf32> to vector<4x256xf32>
    %162 = arith.mulf %161, %126 : vector<4x256xf32>
    %cst_51 = arith.constant dense<0.000000e+00> : vector<256xf32>
    %163 = vector.multi_reduction <add>, %162, %cst_51 [0] : vector<4x256xf32> to vector<256xf32>
    %164 = vector.shape_cast %163 : vector<256xf32> to vector<1x256xf32>
    %165 = vector.broadcast %160 : vector<1x1xf32> to vector<1x256xf32>
    %166 = arith.addf %164, %165 : vector<1x256xf32>
    %167 = arith.negf %166 : vector<1x256xf32>
    %168 = math.exp %167 : vector<1x256xf32>
    %cst_52 = arith.constant 1.000000e+00 : f32
    %169 = vector.broadcast %cst_52 : f32 to vector<1x256xf32>
    %170 = arith.addf %169, %168 : vector<1x256xf32>
    %171 = arith.divf %169, %170 : vector<1x256xf32>
    %172 = arith.mulf %166, %171 : vector<1x256xf32>
    %c0_53 = arith.constant 0 : index
    %c0_54 = arith.constant 0 : index
    %c0_55 = arith.constant 0 : index
    %173 = vector.load %arg2[%c0_53, %c0_54, %c0_55] : memref<1x4x256xf32, #tpu.memory_space<vmem>>, vector<1x4x256xf32>
    %174 = vector.shape_cast %173 : vector<1x4x256xf32> to vector<4x256xf32>
    %175 = vector.broadcast %172 : vector<1x256xf32> to vector<4x256xf32>
    %176 = arith.mulf %174, %175 : vector<4x256xf32>
    %c0_56 = arith.constant 0 : index
    %c0_57 = arith.constant 0 : index
    %c0_58 = arith.constant 0 : index
    %177 = vector.load %arg15[%c0_56, %c0_57, %c0_58] : memref<1x4x256xf32, #tpu.memory_space<vmem>>, vector<1x4x256xf32>
    %178 = vector.shape_cast %177 : vector<1x4x256xf32> to vector<4x256xf32>
    %179 = vector.shape_cast %176 : vector<4x256xf32> to vector<1x4x256xf32>
    tpu.vector_store %arg15[%c0_56, %c0_57, %c0_58], %179 {strides = array<i32>} : memref<1x4x256xf32, #tpu.memory_space<vmem>>, vector<1x4x256xf32>,
    return
  }
  func.func @transform_0(%arg0: i32) -> (i32, i32, i32) {
    %c0_i32 = arith.constant 0 : i32
    %c0_i32_0 = arith.constant 0 : i32
    %c0_i32_1 = arith.constant 0 : i32
    return %arg0, %c0_i32, %c0_i32_0 : i32, i32, i32
  }
  func.func @transform_1(%arg0: i32) -> (i32, i32, i32) {
    %c0_i32 = arith.constant 0 : i32
    %c0_i32_0 = arith.constant 0 : i32
    %c0_i32_1 = arith.constant 0 : i32
    return %arg0, %c0_i32, %c0_i32_0 : i32, i32, i32
  }
  func.func @transform_2(%arg0: i32) -> (i32, i32) {
    %c0_i32 = arith.constant 0 : i32
    %c0_i32_0 = arith.constant 0 : i32
    %c0_i32_1 = arith.constant 0 : i32
    return %c0_i32, %c0_i32_0 : i32, i32
  }
  func.func @transform_3(%arg0: i32) -> (i32, i32) {
    %c0_i32 = arith.constant 0 : i32
    %c0_i32_0 = arith.constant 0 : i32
    %c0_i32_1 = arith.constant 0 : i32
    return %c0_i32, %c0_i32_0 : i32, i32
  }
  func.func @transform_4(%arg0: i32) -> (i32, i32) {
    %c0_i32 = arith.constant 0 : i32
    %c0_i32_0 = arith.constant 0 : i32
    %c0_i32_1 = arith.constant 0 : i32
    return %c0_i32, %c0_i32_0 : i32, i32
  }
  func.func @transform_5(%arg0: i32) -> (i32, i32) {
    %c0_i32 = arith.constant 0 : i32
    %c0_i32_0 = arith.constant 0 : i32
    %c0_i32_1 = arith.constant 0 : i32
    return %c0_i32, %c0_i32_0 : i32, i32
  }
  func.func @transform_6(%arg0: i32) -> (i32, i32) {
    %c0_i32 = arith.constant 0 : i32
    %c0_i32_0 = arith.constant 0 : i32
    %c0_i32_1 = arith.constant 0 : i32
    return %c0_i32, %c0_i32_0 : i32, i32
  }
  func.func @transform_7(%arg0: i32) -> (i32, i32) {
    %c0_i32 = arith.constant 0 : i32
    %c0_i32_0 = arith.constant 0 : i32
    %c0_i32_1 = arith.constant 0 : i32
    return %c0_i32, %c0_i32_0 : i32, i32
  }
  func.func @transform_8(%arg0: i32) -> (i32, i32) {
    %c0_i32 = arith.constant 0 : i32
    %c0_i32_0 = arith.constant 0 : i32
    %c0_i32_1 = arith.constant 0 : i32
    return %c0_i32, %c0_i32_0 : i32, i32
  }
  func.func @transform_9(%arg0: i32) -> (i32, i32) {
    %c0_i32 = arith.constant 0 : i32
    %c0_i32_0 = arith.constant 0 : i32
    %c0_i32_1 = arith.constant 0 : i32
    return %c0_i32, %c0_i32_0 : i32, i32
  }
  func.func @transform_10(%arg0: i32) -> (i32, i32) {
    %c0_i32 = arith.constant 0 : i32
    %c0_i32_0 = arith.constant 0 : i32
    %c0_i32_1 = arith.constant 0 : i32
    return %c0_i32, %c0_i32_0 : i32, i32
  }
  func.func @transform_11(%arg0: i32) -> (i32, i32) {
    %c0_i32 = arith.constant 0 : i32
    %c0_i32_0 = arith.constant 0 : i32
    %c0_i32_1 = arith.constant 0 : i32
    return %c0_i32, %c0_i32_0 : i32, i32
  }
  func.func @transform_12(%arg0: i32) -> (i32, i32) {
    %c0_i32 = arith.constant 0 : i32
    %c0_i32_0 = arith.constant 0 : i32
    %c0_i32_1 = arith.constant 0 : i32
    return %c0_i32, %c0_i32_0 : i32, i32
  }
  func.func @transform_13(%arg0: i32) -> (i32, i32) {
    %c0_i32 = arith.constant 0 : i32
    %c0_i32_0 = arith.constant 0 : i32
    %c0_i32_1 = arith.constant 0 : i32
    return %c0_i32, %c0_i32_0 : i32, i32
  }
  func.func @transform_14(%arg0: i32) -> (i32, i32, i32) {
    %c0_i32 = arith.constant 0 : i32
    %c0_i32_0 = arith.constant 0 : i32
    %c0_i32_1 = arith.constant 0 : i32
    return %arg0, %c0_i32, %c0_i32_0 : i32, i32, i32
  }
}

</mosaic_0001>

<llo_original>
// kernel: tpu_custom_call.1
$region0: #{tpu_custom_call.1}
  #allocation0 [shape = 'u32[]', space=smem, size = 0x4, offset = 0x4, fixed_abs, tag = 'smem constant byte address 0x4 - core index']
  #allocation1 [shape = 'u32[144,128]{1,0:T(1,128)}', space=vmem, size = 0x12000, scoped, tag = 'internal scratch']
  #allocation2 [shape = 'f32[1,1]{1,0:T(1,128)S(1)}', space=vmem, size = 0x200, scoped, tag = 'scoped memory for tpu_custom_call.1']
  %s0 = inlined_call_operand.vmem [shape: f32[2,4,256], index: 0, kind: input, shape index: {}]
  %s1 = inlined_call_operand.vmem [shape: f32[2,4,256], index: 1, kind: input, shape index: {}]
  %s2 = inlined_call_operand.vmem [shape: f32[4,4], index: 2, kind: input, shape index: {}]
  %s3 = inlined_call_operand.vmem [shape: f32[4,1], index: 3, kind: input, shape index: {}]
  %s4 = inlined_call_operand.vmem [shape: f32[4,1], index: 4, kind: input, shape index: {}]
  %s5 = inlined_call_operand.vmem [shape: f32[4,1], index: 5, kind: input, shape index: {}]
  %s6 = inlined_call_operand.vmem [shape: f32[4,4], index: 6, kind: input, shape index: {}]
  %s7 = inlined_call_operand.vmem [shape: f32[4,1], index: 7, kind: input, shape index: {}]
  %s8 = inlined_call_operand.vmem [shape: f32[4,1], index: 8, kind: input, shape index: {}]
  %s9 = inlined_call_operand.vmem [shape: f32[4,1], index: 9, kind: input, shape index: {}]
  %s10 = inlined_call_operand.vmem [shape: f32[4,1], index: 10, kind: input, shape index: {}]
  %s11 = inlined_call_operand.vmem [shape: f32[4,1], index: 11, kind: input, shape index: {}]
  %s12 = inlined_call_operand.vmem [shape: f32[4,1], index: 12, kind: input, shape index: {}]
  %s13 = inlined_call_operand.<no memory space> [shape: f32[1,1], index: 13, kind: input, shape index: {}]
  %s14 = inlined_call_operand.hbm [shape: f32[2,4,256], index: 14, kind: output, shape index: {}]
  %s15 = sld [smem:[#allocation0]]
  $region89: #{tpu_custom_call.1} parent=0
    _
  %s17 = ssub.s32 1, %s15
  %s18 = scalar_select 0, %s17, %s15
  %v19 = vstv %s13
  %20 = vst [vmem:[#allocation2] sm:$0x1] %v19
  $region1: #{tpu_custom_call.1} parent=0
    #allocation3 [shape = 'u8[8192]{0}', space=vmem, size = 0x2000, scoped, tag = 'output window, operand 0']
    #allocation4 [shape = 's32[2]{0}', space=sflag, size = 0x8, scoped, tag = 'scoped memory for tpu_custom_call.1']
    %21 = vsyncpa [#allocation4], 0
    %s22 = scalar_lea.sflag [#allocation4], 1
    %23 = vsyncpa %s22, 0
    loop: start=0, step=1, limit=4
    $region2: #{tpu_custom_call.1} parent=1 // loop_pre_header
      _
    $region3: #{tpu_custom_call.1} parent=1 // loop_header
      %s25 = sphi 0, %s29
      %p26 = scmp.ge.s32.totalorder %s25, 4
      %s35 = sphi 0, %s37
      %s38 = sphi 0, %s35
      %s39 = sphi 0, %s38
      %s55 = sphi 0, %s39
      %s61 = sphi 0, %s63
      %s64 = sphi 0, %s61
      %s65 = sphi 0, %s64
      %s81 = sphi 0, %s65
      %s85 = sphi 0, %s85
      %s87 = sphi 0, %s85
      %s88 = sphi 0, %s87
      %s102 = sphi 0, %s88
      %s106 = sphi 0, %s106
      %s108 = sphi 0, %s106
      %s109 = sphi 0, %s108
      %s123 = sphi 0, %s109
      %s127 = sphi 0, %s127
      %s129 = sphi 0, %s127
      %s130 = sphi 0, %s129
      %s144 = sphi 0, %s130
      %s148 = sphi 0, %s148
      %s150 = sphi 0, %s148
      %s151 = sphi 0, %s150
      %s165 = sphi 0, %s151
      %s169 = sphi 0, %s169
      %s171 = sphi 0, %s169
      %s172 = sphi 0, %s171
      %s186 = sphi 0, %s172
      %s190 = sphi 0, %s190
      %s192 = sphi 0, %s190
      %s193 = sphi 0, %s192
      %s207 = sphi 0, %s193
      %s211 = sphi 0, %s211
      %s213 = sphi 0, %s211
      %s214 = sphi 0, %s213
      %s228 = sphi 0, %s214
      %s232 = sphi 0, %s232
      %s234 = sphi 0, %s232
      %s235 = sphi 0, %s234
      %s249 = sphi 0, %s235
      %s253 = sphi 0, %s253
      %s255 = sphi 0, %s253
      %s256 = sphi 0, %s255
      %s270 = sphi 0, %s256
      %s274 = sphi 0, %s274
      %s276 = sphi 0, %s274
      %s277 = sphi 0, %s276
      %s291 = sphi 0, %s277
      %s295 = sphi 0, %s295
      %s297 = sphi 0, %s295
      %s298 = sphi 0, %s297
      %s312 = sphi 0, %s298
      %s316 = sphi 0, %s316
      %s318 = sphi 0, %s316
      %s319 = sphi 0, %s318
      %s333 = sphi 0, %s319
      %s339 = sphi 0, %s341
      %s342 = sphi 0, %s339
      %s343 = sphi 0, %s342
      %s359 = sphi 0, %s343
    $region4: #{tpu_custom_call.1} parent=1 // loop_header_branch
      %28 = sbr.rel (%p26) target = $region8
    $region5: #{tpu_custom_call.1} parent=1 // loop_body
      %s30 = ssub.s32 %s25, 1
      %s31 = ssub.s32 %s25, 2
      %s32 = sadd.s32 %s25, 1
      %s33 = ssub.s32 %s25, %s32
      %p34 = scmp.eq.s32.totalorder %s33, 0
      %s36 = sadd.s32 %s35, 1
      %s37 = scalar_select %p34, %s35, %s36
      %p40 = pneg %p34
      %p41 = scmp.eq.s32.totalorder %s25, 1
      %p42 = por %p40, %p41
      %p43 = scmp.ne.s32.totalorder %s35, %s38
      %p44 = scmp.eq.s32.totalorder %s25, 0
      %p45 = por %p43, %p44
      %p46 = scmp.ne.s32.totalorder %s35, %s38
      %p47 = scmp.eq.s32.totalorder %s30, 1
      %p48 = por %p46, %p47
      %p49 = scmp.ne.s32.totalorder %s38, %s39
      %p50 = scmp.eq.s32.totalorder %s30, 0
      %p51 = por %p49, %p50
      %p52 = scmp.ne.s32.totalorder %s38, %s39
      %p53 = scmp.eq.s32.totalorder %s31, 1
      %p54 = por %p52, %p53
      %p56 = scmp.ne.s32.totalorder %s39, %s55
      %p57 = scmp.eq.s32.totalorder %s31, 0
      %p58 = por %p56, %p57
      %s59 = ssub.s32 %s25, %s32
      %p60 = scmp.eq.s32.totalorder %s59, 0
      %s62 = sadd.s32 %s61, 1
      %s63 = scalar_select %p60, %s61, %s62
      %p66 = pneg %p60
      %p67 = scmp.eq.s32.totalorder %s25, 1
      %p68 = por %p66, %p67
      %p69 = scmp.ne.s32.totalorder %s61, %s64
      %p70 = scmp.eq.s32.totalorder %s25, 0
      %p71 = por %p69, %p70
      %p72 = scmp.ne.s32.totalorder %s61, %s64
      %p73 = scmp.eq.s32.totalorder %s30, 1
      %p74 = por %p72, %p73
      %p75 = scmp.ne.s32.totalorder %s64, %s65
      %p76 = scmp.eq.s32.totalorder %s30, 0
      %p77 = por %p75, %p76
      %p78 = scmp.ne.s32.totalorder %s64, %s65
      %p79 = scmp.eq.s32.totalorder %s31, 1
      %p80 = por %p78, %p79
      %p82 = scmp.ne.s32.totalorder %s65, %s81
      %p83 = scmp.eq.s32.totalorder %s31, 0
      %p84 = por %p82, %p83
      %s86 = sadd.s32 %s85, 1
      %p89 = scmp.eq.s32.totalorder %s25, 1
      %p90 = scmp.ne.s32.totalorder %s85, %s87
      %p91 = scmp.eq.s32.totalorder %s25, 0
      %p92 = por %p90, %p91
      %p93 = scmp.ne.s32.totalorder %s85, %s87
      %p94 = scmp.eq.s32.totalorder %s30, 1
      %p95 = por %p93, %p94
      %p96 = scmp.ne.s32.totalorder %s87, %s88
      %p97 = scmp.eq.s32.totalorder %s30, 0
      %p98 = por %p96, %p97
      %p99 = scmp.ne.s32.totalorder %s87, %s88
      %p100 = scmp.eq.s32.totalorder %s31, 1
      %p101 = por %p99, %p100
      %p103 = scmp.ne.s32.totalorder %s88, %s102
      %p104 = scmp.eq.s32.totalorder %s31, 0
      %p105 = por %p103, %p104
      %s107 = sadd.s32 %s106, 1
      %p110 = scmp.eq.s32.totalorder %s25, 1
      %p111 = scmp.ne.s32.totalorder %s106, %s108
      %p112 = scmp.eq.s32.totalorder %s25, 0
      %p113 = por %p111, %p112
      %p114 = scmp.ne.s32.totalorder %s106, %s108
      %p115 = scmp.eq.s32.totalorder %s30, 1
      %p116 = por %p114, %p115
      %p117 = scmp.ne.s32.totalorder %s108, %s109
      %p118 = scmp.eq.s32.totalorder %s30, 0
      %p119 = por %p117, %p118
      %p120 = scmp.ne.s32.totalorder %s108, %s109
      %p121 = scmp.eq.s32.totalorder %s31, 1
      %p122 = por %p120, %p121
      %p124 = scmp.ne.s32.totalorder %s109, %s123
      %p125 = scmp.eq.s32.totalorder %s31, 0
      %p126 = por %p124, %p125
      %s128 = sadd.s32 %s127, 1
      %p131 = scmp.eq.s32.totalorder %s25, 1
      %p132 = scmp.ne.s32.totalorder %s127, %s129
      %p133 = scmp.eq.s32.totalorder %s25, 0
      %p134 = por %p132, %p133
      %p135 = scmp.ne.s32.totalorder %s127, %s129
      %p136 = scmp.eq.s32.totalorder %s30, 1
      %p137 = por %p135, %p136
      %p138 = scmp.ne.s32.totalorder %s129, %s130
      %p139 = scmp.eq.s32.totalorder %s30, 0
      %p140 = por %p138, %p139
      %p141 = scmp.ne.s32.totalorder %s129, %s130
      %p142 = scmp.eq.s32.totalorder %s31, 1
      %p143 = por %p141, %p142
      %p145 = scmp.ne.s32.totalorder %s130, %s144
      %p146 = scmp.eq.s32.totalorder %s31, 0
      %p147 = por %p145, %p146
      %s149 = sadd.s32 %s148, 1
      %p152 = scmp.eq.s32.totalorder %s25, 1
      %p153 = scmp.ne.s32.totalorder %s148, %s150
      %p154 = scmp.eq.s32.totalorder %s25, 0
      %p155 = por %p153, %p154
      %p156 = scmp.ne.s32.totalorder %s148, %s150
      %p157 = scmp.eq.s32.totalorder %s30, 1
      %p158 = por %p156, %p157
      %p159 = scmp.ne.s32.totalorder %s150, %s151
      %p160 = scmp.eq.s32.totalorder %s30, 0
      %p161 = por %p159, %p160
      %p162 = scmp.ne.s32.totalorder %s150, %s151
      %p163 = scmp.eq.s32.totalorder %s31, 1
      %p164 = por %p162, %p163
      %p166 = scmp.ne.s32.totalorder %s151, %s165
      %p167 = scmp.eq.s32.totalorder %s31, 0
      %p168 = por %p166, %p167
      %s170 = sadd.s32 %s169, 1
      %p173 = scmp.eq.s32.totalorder %s25, 1
      %p174 = scmp.ne.s32.totalorder %s169, %s171
      %p175 = scmp.eq.s32.totalorder %s25, 0
      %p176 = por %p174, %p175
      %p177 = scmp.ne.s32.totalorder %s169, %s171
      %p178 = scmp.eq.s32.totalorder %s30, 1
      %p179 = por %p177, %p178
      %p180 = scmp.ne.s32.totalorder %s171, %s172
      %p181 = scmp.eq.s32.totalorder %s30, 0
      %p182 = por %p180, %p181
      %p183 = scmp.ne.s32.totalorder %s171, %s172
      %p184 = scmp.eq.s32.totalorder %s31, 1
      %p185 = por %p183, %p184
      %p187 = scmp.ne.s32.totalorder %s172, %s186
      %p188 = scmp.eq.s32.totalorder %s31, 0
      %p189 = por %p187, %p188
      %s191 = sadd.s32 %s190, 1
      %p194 = scmp.eq.s32.totalorder %s25, 1
      %p195 = scmp.ne.s32.totalorder %s190, %s192
      %p196 = scmp.eq.s32.totalorder %s25, 0
      %p197 = por %p195, %p196
      %p198 = scmp.ne.s32.totalorder %s190, %s192
      %p199 = scmp.eq.s32.totalorder %s30, 1
      %p200 = por %p198, %p199
      %p201 = scmp.ne.s32.totalorder %s192, %s193
      %p202 = scmp.eq.s32.totalorder %s30, 0
      %p203 = por %p201, %p202
      %p204 = scmp.ne.s32.totalorder %s192, %s193
      %p205 = scmp.eq.s32.totalorder %s31, 1
      %p206 = por %p204, %p205
      %p208 = scmp.ne.s32.totalorder %s193, %s207
      %p209 = scmp.eq.s32.totalorder %s31, 0
      %p210 = por %p208, %p209
      %s212 = sadd.s32 %s211, 1
      %p215 = scmp.eq.s32.totalorder %s25, 1
      %p216 = scmp.ne.s32.totalorder %s211, %s213
      %p217 = scmp.eq.s32.totalorder %s25, 0
      %p218 = por %p216, %p217
      %p219 = scmp.ne.s32.totalorder %s211, %s213
      %p220 = scmp.eq.s32.totalorder %s30, 1
      %p221 = por %p219, %p220
      %p222 = scmp.ne.s32.totalorder %s213, %s214
      %p223 = scmp.eq.s32.totalorder %s30, 0
      %p224 = por %p222, %p223
      %p225 = scmp.ne.s32.totalorder %s213, %s214
      %p226 = scmp.eq.s32.totalorder %s31, 1
      %p227 = por %p225, %p226
      %p229 = scmp.ne.s32.totalorder %s214, %s228
      %p230 = scmp.eq.s32.totalorder %s31, 0
      %p231 = por %p229, %p230
      %s233 = sadd.s32 %s232, 1
      %p236 = scmp.eq.s32.totalorder %s25, 1
      %p237 = scmp.ne.s32.totalorder %s232, %s234
      %p238 = scmp.eq.s32.totalorder %s25, 0
      %p239 = por %p237, %p238
      %p240 = scmp.ne.s32.totalorder %s232, %s234
      %p241 = scmp.eq.s32.totalorder %s30, 1
      %p242 = por %p240, %p241
      %p243 = scmp.ne.s32.totalorder %s234, %s235
      %p244 = scmp.eq.s32.totalorder %s30, 0
      %p245 = por %p243, %p244
      %p246 = scmp.ne.s32.totalorder %s234, %s235
      %p247 = scmp.eq.s32.totalorder %s31, 1
      %p248 = por %p246, %p247
      %p250 = scmp.ne.s32.totalorder %s235, %s249
      %p251 = scmp.eq.s32.totalorder %s31, 0
      %p252 = por %p250, %p251
      %s254 = sadd.s32 %s253, 1
      %p257 = scmp.eq.s32.totalorder %s25, 1
      %p258 = scmp.ne.s32.totalorder %s253, %s255
      %p259 = scmp.eq.s32.totalorder %s25, 0
      %p260 = por %p258, %p259
      %p261 = scmp.ne.s32.totalorder %s253, %s255
      %p262 = scmp.eq.s32.totalorder %s30, 1
      %p263 = por %p261, %p262
      %p264 = scmp.ne.s32.totalorder %s255, %s256
      %p265 = scmp.eq.s32.totalorder %s30, 0
      %p266 = por %p264, %p265
      %p267 = scmp.ne.s32.totalorder %s255, %s256
      %p268 = scmp.eq.s32.totalorder %s31, 1
      %p269 = por %p267, %p268
      %p271 = scmp.ne.s32.totalorder %s256, %s270
      %p272 = scmp.eq.s32.totalorder %s31, 0
      %p273 = por %p271, %p272
      %s275 = sadd.s32 %s274, 1
      %p278 = scmp.eq.s32.totalorder %s25, 1
      %p279 = scmp.ne.s32.totalorder %s274, %s276
      %p280 = scmp.eq.s32.totalorder %s25, 0
      %p281 = por %p279, %p280
      %p282 = scmp.ne.s32.totalorder %s274, %s276
      %p283 = scmp.eq.s32.totalorder %s30, 1
      %p284 = por %p282, %p283
      %p285 = scmp.ne.s32.totalorder %s276, %s277
      %p286 = scmp.eq.s32.totalorder %s30, 0
      %p287 = por %p285, %p286
      %p288 = scmp.ne.s32.totalorder %s276, %s277
      %p289 = scmp.eq.s32.totalorder %s31, 1
      %p290 = por %p288, %p289
      %p292 = scmp.ne.s32.totalorder %s277, %s291
      %p293 = scmp.eq.s32.totalorder %s31, 0
      %p294 = por %p292, %p293
      %s296 = sadd.s32 %s295, 1
      %p299 = scmp.eq.s32.totalorder %s25, 1
      %p300 = scmp.ne.s32.totalorder %s295, %s297
      %p301 = scmp.eq.s32.totalorder %s25, 0
      %p302 = por %p300, %p301
      %p303 = scmp.ne.s32.totalorder %s295, %s297
      %p304 = scmp.eq.s32.totalorder %s30, 1
      %p305 = por %p303, %p304
      %p306 = scmp.ne.s32.totalorder %s297, %s298
      %p307 = scmp.eq.s32.totalorder %s30, 0
      %p308 = por %p306, %p307
      %p309 = scmp.ne.s32.totalorder %s297, %s298
      %p310 = scmp.eq.s32.totalorder %s31, 1
      %p311 = por %p309, %p310
      %p313 = scmp.ne.s32.totalorder %s298, %s312
      %p314 = scmp.eq.s32.totalorder %s31, 0
      %p315 = por %p313, %p314
      %s317 = sadd.s32 %s316, 1
      %p320 = scmp.eq.s32.totalorder %s25, 1
      %p321 = scmp.ne.s32.totalorder %s316, %s318
      %p322 = scmp.eq.s32.totalorder %s25, 0
      %p323 = por %p321, %p322
      %p324 = scmp.ne.s32.totalorder %s316, %s318
      %p325 = scmp.eq.s32.totalorder %s30, 1
      %p326 = por %p324, %p325
      %p327 = scmp.ne.s32.totalorder %s318, %s319
      %p328 = scmp.eq.s32.totalorder %s30, 0
      %p329 = por %p327, %p328
      %p330 = scmp.ne.s32.totalorder %s318, %s319
      %p331 = scmp.eq.s32.totalorder %s31, 1
      %p332 = por %p330, %p331
      %p334 = scmp.ne.s32.totalorder %s319, %s333
      %p335 = scmp.eq.s32.totalorder %s31, 0
      %p336 = por %p334, %p335
      %s337 = ssub.s32 %s25, %s32
      %p338 = scmp.eq.s32.totalorder %s337, 0
      %s340 = sadd.s32 %s339, 1
      %s341 = scalar_select %p338, %s339, %s340
      %p344 = pneg %p338
      %p345 = scmp.eq.s32.totalorder %s25, 1
      %p346 = por %p344, %p345
      %p347 = scmp.ne.s32.totalorder %s339, %s342
      %p348 = scmp.eq.s32.totalorder %s25, 0
      %p349 = por %p347, %p348
      %p350 = scmp.ne.s32.totalorder %s339, %s342
      %p351 = scmp.eq.s32.totalorder %s30, 1
      %p352 = por %p350, %p351
      %p353 = scmp.ne.s32.totalorder %s342, %s343
      %p354 = scmp.eq.s32.totalorder %s30, 0
      %p355 = por %p353, %p354
      %p356 = scmp.ne.s32.totalorder %s342, %s343
      %p357 = scmp.eq.s32.totalorder %s31, 1
      %p358 = por %p356, %p357
      %p360 = scmp.ne.s32.totalorder %s343, %s359
      %p361 = scmp.eq.s32.totalorder %s31, 0
      %p362 = por %p360, %p361
      %p363 = scmp.le.s32.totalorder 1, %s25
      %p364 = scmp.lt.s32.totalorder %s25, 3
      %p365 = pnand %p363, %p364
      %p366 = pneg %p365
      // Predicated region
      $region9: #{tpu_custom_call.1} parent=5 // pred_check
        _
      $region10: #{tpu_custom_call.1} parent=5 // pred_check_branch
        %368 = sbr.rel (%p365) target = $region12
      $region11: #{tpu_custom_call.1} parent=5 // pred_region
        %s369 = ssub.s32 %s25, 1
        // Predicated region
        $region13: #{tpu_custom_call.1} parent=11 // pred_check
          %p370 = pneg %p98
        $region14: #{tpu_custom_call.1} parent=11 // pred_check_branch
          %372 = sbr.rel (%p370) target = $region16
        $region15: #{tpu_custom_call.1} parent=11 // pred_region
          _
        $region16: #{tpu_custom_call.1} parent=11 // pred_fallthru
          _
        // Predicated region
        $region17: #{tpu_custom_call.1} parent=11 // pred_check
          %p373 = pneg %p119
        $region18: #{tpu_custom_call.1} parent=11 // pred_check_branch
          %375 = sbr.rel (%p373) target = $region20
        $region19: #{tpu_custom_call.1} parent=11 // pred_region
          _
        $region20: #{tpu_custom_call.1} parent=11 // pred_fallthru
          _
        // Predicated region
        $region21: #{tpu_custom_call.1} parent=11 // pred_check
          %p376 = pneg %p140
        $region22: #{tpu_custom_call.1} parent=11 // pred_check_branch
          %378 = sbr.rel (%p376) target = $region24
        $region23: #{tpu_custom_call.1} parent=11 // pred_region
          _
        $region24: #{tpu_custom_call.1} parent=11 // pred_fallthru
          _
        // Predicated region
        $region25: #{tpu_custom_call.1} parent=11 // pred_check
          %p379 = pneg %p161
        $region26: #{tpu_custom_call.1} parent=11 // pred_check_branch
          %381 = sbr.rel (%p379) target = $region28
        $region27: #{tpu_custom_call.1} parent=11 // pred_region
          _
        $region28: #{tpu_custom_call.1} parent=11 // pred_fallthru
          _
        // Predicated region
        $region29: #{tpu_custom_call.1} parent=11 // pred_check
          %p382 = pneg %p182
        $region30: #{tpu_custom_call.1} parent=11 // pred_check_branch
          %384 = sbr.rel (%p382) target = $region32
        $region31: #{tpu_custom_call.1} parent=11 // pred_region
          _
        $region32: #{tpu_custom_call.1} parent=11 // pred_fallthru
          _
        // Predicated region
        $region33: #{tpu_custom_call.1} parent=11 // pred_check
          %p385 = pneg %p203
        $region34: #{tpu_custom_call.1} parent=11 // pred_check_branch
          %387 = sbr.rel (%p385) target = $region36
        $region35: #{tpu_custom_call.1} parent=11 // pred_region
          _
        $region36: #{tpu_custom_call.1} parent=11 // pred_fallthru
          _
        // Predicated region
        $region37: #{tpu_custom_call.1} parent=11 // pred_check
          %p388 = pneg %p224
        $region38: #{tpu_custom_call.1} parent=11 // pred_check_branch
          %390 = sbr.rel (%p388) target = $region40
        $region39: #{tpu_custom_call.1} parent=11 // pred_region
          _
        $region40: #{tpu_custom_call.1} parent=11 // pred_fallthru
          _
        // Predicated region
        $region41: #{tpu_custom_call.1} parent=11 // pred_check
          %p391 = pneg %p245
        $region42: #{tpu_custom_call.1} parent=11 // pred_check_branch
          %393 = sbr.rel (%p391) target = $region44
        $region43: #{tpu_custom_call.1} parent=11 // pred_region
          _
        $region44: #{tpu_custom_call.1} parent=11 // pred_fallthru
          _
        // Predicated region
        $region45: #{tpu_custom_call.1} parent=11 // pred_check
          %p394 = pneg %p266
        $region46: #{tpu_custom_call.1} parent=11 // pred_check_branch
          %396 = sbr.rel (%p394) target = $region48
        $region47: #{tpu_custom_call.1} parent=11 // pred_region
          _
        $region48: #{tpu_custom_call.1} parent=11 // pred_fallthru
          _
        // Predicated region
        $region49: #{tpu_custom_call.1} parent=11 // pred_check
          %p397 = pneg %p287
        $region50: #{tpu_custom_call.1} parent=11 // pred_check_branch
          %399 = sbr.rel (%p397) target = $region52
        $region51: #{tpu_custom_call.1} parent=11 // pred_region
          _
        $region52: #{tpu_custom_call.1} parent=11 // pred_fallthru
          _
        // Predicated region
        $region53: #{tpu_custom_call.1} parent=11 // pred_check
          %p400 = pneg %p308
        $region54: #{tpu_custom_call.1} parent=11 // pred_check_branch
          %402 = sbr.rel (%p400) target = $region56
        $region55: #{tpu_custom_call.1} parent=11 // pred_region
          _
        $region56: #{tpu_custom_call.1} parent=11 // pred_fallthru
          _
        // Predicated region
        $region57: #{tpu_custom_call.1} parent=11 // pred_check
          %p403 = pneg %p329
        $region58: #{tpu_custom_call.1} parent=11 // pred_check_branch
          %405 = sbr.rel (%p403) target = $region60
        $region59: #{tpu_custom_call.1} parent=11 // pred_region
          _
        $region60: #{tpu_custom_call.1} parent=11 // pred_fallthru
          _
      $region12: #{tpu_custom_call.1} parent=5 // pred_fallthru
        _
      %p406 = scmp.lt.s32.totalorder %s25, 2
      // Predicated region
      $region61: #{tpu_custom_call.1} parent=5 // pred_check
        %p407 = pneg %p406
      $region62: #{tpu_custom_call.1} parent=5 // pred_check_branch
        %409 = sbr.rel (%p407) target = $region64
      $region63: #{tpu_custom_call.1} parent=5 // pred_region
        // Predicated region
        $region65: #{tpu_custom_call.1} parent=63 // pred_check
          %p410 = pneg %p45
        $region66: #{tpu_custom_call.1} parent=63 // pred_check_branch
          %412 = sbr.rel (%p410) target = $region68
        $region67: #{tpu_custom_call.1} parent=63 // pred_region
          %p413 = scmp.lt.s32.totalorder %s25, 1
          %s414 = scalar_select %p413, %s25, 1
          %s415 = smul.addr %s414, 2
          %s416 = smul.addr %s415, 4
          %s417 = scalar_lea.vmem %s0, %s416
        $region68: #{tpu_custom_call.1} parent=63 // pred_fallthru
          _
        // Predicated region
        $region69: #{tpu_custom_call.1} parent=63 // pred_check
          %p418 = pneg %p71
        $region70: #{tpu_custom_call.1} parent=63 // pred_check_branch
          %420 = sbr.rel (%p418) target = $region72
        $region71: #{tpu_custom_call.1} parent=63 // pred_region
          %p421 = scmp.lt.s32.totalorder %s25, 1
          %s422 = scalar_select %p421, %s25, 1
          %s423 = smul.addr %s422, 2
          %s424 = smul.addr %s423, 4
          %s425 = scalar_lea.vmem %s1, %s424
        $region72: #{tpu_custom_call.1} parent=63 // pred_fallthru
          _
      $region64: #{tpu_custom_call.1} parent=5 // pred_fallthru
        _
      %p426 = scmp.le.s32.totalorder 1, %s25
      %p427 = scmp.lt.s32.totalorder %s25, 3
      %p428 = pnand %p426, %p427
      %p429 = pneg %p428
      // Predicated region
      $region73: #{tpu_custom_call.1} parent=5 // pred_check
        _
      $region74: #{tpu_custom_call.1} parent=5 // pred_check_branch
        %431 = sbr.rel (%p428) target = $region76
      $region75: #{tpu_custom_call.1} parent=5 // pred_region
        %s432 = ssub.s32 %s25, 1
        %p433 = scmp.lt.s32.totalorder %s30, 1
        %s434 = scalar_select %p433, %s30, 1
        %s435 = smul.addr %s434, 2
        %s436 = smul.addr %s435, 4
        %s437 = scalar_lea.vmem %s0, %s436
        %p438 = pneg %p51
        %p439 = pneg %p48
        %p440 = scmp.lt.s32.totalorder %s30, 1
        %s441 = scalar_select %p440, %s30, 1
        %s442 = smul.addr %s441, 2
        %s443 = smul.addr %s442, 4
        %s444 = scalar_lea.vmem %s1, %s443
        %p445 = pneg %p77
        %p446 = pneg %p74
        %p447 = pneg %p98
        %p448 = pneg %p95
        %p449 = pneg %p119
        %p450 = pneg %p116
        %p451 = pneg %p140
        %p452 = pneg %p137
        %p453 = pneg %p161
        %p454 = pneg %p158
        %p455 = pneg %p182
        %p456 = pneg %p179
        %p457 = pneg %p203
        %p458 = pneg %p200
        %p459 = pneg %p224
        %p460 = pneg %p221
        %p461 = pneg %p245
        %p462 = pneg %p242
        %p463 = pneg %p266
        %p464 = pneg %p263
        %p465 = pneg %p287
        %p466 = pneg %p284
        %p467 = pneg %p308
        %p468 = pneg %p305
        %p469 = pneg %p329
        %p470 = pneg %p326
        %p471 = pneg %p355
        %p472 = pneg %p352
        %s473 = sand.u32 %s342, 1
        %s474 = scalar_lea.sflag [#allocation4], %s473
        %s475 = sand.u32 %s342, 1
        %s476 = smul.addr %s475, 8
        %s477 = scalar_lea.vmem [#allocation3], %s476
        %p478 = scmp.lt.s32.totalorder %s30, 1
        %s479 = scalar_select %p478, %s30, 1
        %s480 = smul.addr %s479, 2
        %s481 = smul.addr %s480, 4
        %s482 = scalar_lea.vmem %s0, %s481
        %p483 = scmp.lt.s32.totalorder %s30, 1
        %s484 = scalar_select %p483, %s30, 1
        %s485 = smul.addr %s484, 2
        %s486 = smul.addr %s485, 4
        %s487 = scalar_lea.vmem %s1, %s486
        %v488 = vld [vmem:[%s482] sm:$0xff]
        %v489 = vld [vmem:[%s2] sm:$0xf]
        %v490 = vld [vmem:[%s3] sm:$0xf]
        %492 = vset.pattern.permute.xlu0 0
        %493 = vperm.xlu0 %492, %v489
        %v494 = vpop.permute.xlu0 %493
        %v497 = vlaneseq
        %v498 = vshrl.u32 %v497, 7
        %v499 = vsub.s32 0, %v498
        %v500 = vrot.slane %v488, %v499
        %v501 = vlaneseq
        %v502 = vshrl.u32 %v501, 7
        %v503 = vsub.s32 4, %v502
        %v504 = vrot.slane %v488, %v503
        %v507 = vlaneseq
        %v508 = vshrl.u32 %v507, 7
        %v509 = vsub.s32 0, %v508
        %v510 = vrot.slane %v500, %v509
        %v511 = vlaneseq
        %v512 = vshrl.u32 %v511, 7
        %v513 = vsub.s32 0, %v512
        %v514 = vrot.slane %v504, %v513
        %v515 = vmul.f32 %v494, %v510
        %v516 = vmul.f32 %v494, %v514
        %518 = vset.pattern.permute.xlu0 0
        %519 = vperm.xlu0 %518, %v490
        %v520 = vpop.permute.xlu0 %519
        %v522 = vadd.f32 %v515, %v520
        %v523 = vadd.f32 %v516, %v520
        %524 = vset.pattern.permute.xlu0 1
        %525 = vperm.xlu0 %524, %v489
        %v526 = vpop.permute.xlu0 %525
        %v528 = vlaneseq
        %v529 = vshrl.u32 %v528, 7
        %v530 = vsub.s32 1, %v529
        %v531 = vrot.slane %v488, %v530
        %v532 = vlaneseq
        %v533 = vshrl.u32 %v532, 7
        %v534 = vsub.s32 5, %v533
        %v535 = vrot.slane %v488, %v534
        %v538 = vlaneseq
        %v539 = vshrl.u32 %v538, 7
        %v540 = vsub.s32 1, %v539
        %v541 = vrot.slane %v531, %v540
        %v542 = vlaneseq
        %v543 = vshrl.u32 %v542, 7
        %v544 = vsub.s32 1, %v543
        %v545 = vrot.slane %v535, %v544
        %v546 = vmul.f32 %v526, %v541
        %v547 = vmul.f32 %v526, %v545
        %v548 = vadd.f32 %v522, %v546
        %v549 = vadd.f32 %v523, %v547
        %550 = vset.pattern.permute.xlu0 2
        %551 = vperm.xlu0 %550, %v489
        %v552 = vpop.permute.xlu0 %551
        %v554 = vlaneseq
        %v555 = vshrl.u32 %v554, 7
        %v556 = vsub.s32 2, %v555
        %v557 = vrot.slane %v488, %v556
        %v558 = vlaneseq
        %v559 = vshrl.u32 %v558, 7
        %v560 = vsub.s32 6, %v559
        %v561 = vrot.slane %v488, %v560
        %v564 = vlaneseq
        %v565 = vshrl.u32 %v564, 7
        %v566 = vsub.s32 2, %v565
        %v567 = vrot.slane %v557, %v566
        %v568 = vlaneseq
        %v569 = vshrl.u32 %v568, 7
        %v570 = vsub.s32 2, %v569
        %v571 = vrot.slane %v561, %v570
        %v572 = vmul.f32 %v552, %v567
        %v573 = vmul.f32 %v552, %v571
        %v574 = vadd.f32 %v548, %v572
        %v575 = vadd.f32 %v549, %v573
        %576 = vset.pattern.permute.xlu0 3
        %577 = vperm.xlu0 %576, %v489
        %v578 = vpop.permute.xlu0 %577
        %v580 = vlaneseq
        %v581 = vshrl.u32 %v580, 7
        %v582 = vsub.s32 3, %v581
        %v583 = vrot.slane %v488, %v582
        %v584 = vlaneseq
        %v585 = vshrl.u32 %v584, 7
        %v586 = vsub.s32 7, %v585
        %v587 = vrot.slane %v488, %v586
        %v590 = vlaneseq
        %v591 = vshrl.u32 %v590, 7
        %v592 = vsub.s32 3, %v591
        %v593 = vrot.slane %v583, %v592
        %v594 = vlaneseq
        %v595 = vshrl.u32 %v594, 7
        %v596 = vsub.s32 3, %v595
        %v597 = vrot.slane %v587, %v596
        %v598 = vmul.f32 %v578, %v593
        %v599 = vmul.f32 %v578, %v597
        %v600 = vadd.f32 %v574, %v598
        %v601 = vadd.f32 %v575, %v599
        %v602 = vld [vmem:[%s4] sm:$0xf]
        %v603 = vld [vmem:[%s5] sm:$0xf]
        %vm604 = vcmask 1043456
        %v605 = vsel %vm604, %v600, 0.0
        %v606 = vsel %vm604, %v601, 0.0
        %v607 = vadd.f32 %v605, %v606
        %608 = vadd.xlane.f32.xlu0 %v607
        %v609 = vpop.xlane.xlu0 %608
        %v610 = vsel %vm604, %v609, 0.0
        %v611 = vrot.slane %v610, 4
        %v612 = vadd.f32 %v610, %v611
        %v613 = vrot.slane %v612, 2
        %v614 = vadd.f32 %v612, %v613
        %v615 = vrot.slane %v614, 1
        %v616 = vadd.f32 %v614, %v615
        %v617 = vmul.f32 %v616, 0.0009765625
        %v618 = vsub.f32 %v600, %v617
        %v619 = vsub.f32 %v601, %v617
        %v620 = vmul.f32 %v618, %v618
        %v621 = vmul.f32 %v619, %v619
        %v622 = vsel %vm604, %v620, 0.0
        %v623 = vsel %vm604, %v621, 0.0
        %v624 = vadd.f32 %v622, %v623
        %625 = vadd.xlane.f32.xlu0 %v624
        %v626 = vpop.xlane.xlu0 %625
        %v627 = vsel %vm604, %v626, 0.0
        %v628 = vrot.slane %v627, 4
        %v629 = vadd.f32 %v627, %v628
        %v630 = vrot.slane %v629, 2
        %v631 = vadd.f32 %v629, %v630
        %v632 = vrot.slane %v631, 1
        %v633 = vadd.f32 %v631, %v632
        %v634 = vmul.f32 %v633, 0.0009765625
        %v635 = vadd.f32 %v634, 1e-05
        %v636 = vrsqrt.pop %v635
        %v637 = vmul.f32 %v636, %v602
        %v638 = vmul.f32 %v617, %v637
        %v639 = vsub.f32 %v603, %v638
        %641 = vset.pattern.permute.xlu0 0
        %642 = vperm.xlu0 %641, %v637
        %v643 = vpop.permute.xlu0 %642
        %v645 = vmul.f32 %v600, %v643
        %v646 = vmul.f32 %v601, %v643
        %648 = vset.pattern.permute.xlu0 0
        %649 = vperm.xlu0 %648, %v639
        %v650 = vpop.permute.xlu0 %649
        %v652 = vadd.f32 %v645, %v650
        %v653 = vadd.f32 %v646, %v650
        %v654 = vld [vmem:[%s487] sm:$0xff]
        %v655 = vld [vmem:[%s6] sm:$0xf]
        %v656 = vld [vmem:[%s7] sm:$0xf]
        %658 = vset.pattern.permute.xlu0 0
        %659 = vperm.xlu0 %658, %v655
        %v660 = vpop.permute.xlu0 %659
        %v663 = vlaneseq
        %v664 = vshrl.u32 %v663, 7
        %v665 = vsub.s32 0, %v664
        %v666 = vrot.slane %v654, %v665
        %v667 = vlaneseq
        %v668 = vshrl.u32 %v667, 7
        %v669 = vsub.s32 4, %v668
        %v670 = vrot.slane %v654, %v669
        %v673 = vlaneseq
        %v674 = vshrl.u32 %v673, 7
        %v675 = vsub.s32 0, %v674
        %v676 = vrot.slane %v666, %v675
        %v677 = vlaneseq
        %v678 = vshrl.u32 %v677, 7
        %v679 = vsub.s32 0, %v678
        %v680 = vrot.slane %v670, %v679
        %v681 = vmul.f32 %v660, %v676
        %v682 = vmul.f32 %v660, %v680
        %684 = vset.pattern.permute.xlu0 0
        %685 = vperm.xlu0 %684, %v656
        %v686 = vpop.permute.xlu0 %685
        %v688 = vadd.f32 %v681, %v686
        %v689 = vadd.f32 %v682, %v686
        %690 = vset.pattern.permute.xlu0 1
        %691 = vperm.xlu0 %690, %v655
        %v692 = vpop.permute.xlu0 %691
        %v694 = vlaneseq
        %v695 = vshrl.u32 %v694, 7
        %v696 = vsub.s32 1, %v695
        %v697 = vrot.slane %v654, %v696
        %v698 = vlaneseq
        %v699 = vshrl.u32 %v698, 7
        %v700 = vsub.s32 5, %v699
        %v701 = vrot.slane %v654, %v700
        %v704 = vlaneseq
        %v705 = vshrl.u32 %v704, 7
        %v706 = vsub.s32 1, %v705
        %v707 = vrot.slane %v697, %v706
        %v708 = vlaneseq
        %v709 = vshrl.u32 %v708, 7
        %v710 = vsub.s32 1, %v709
        %v711 = vrot.slane %v701, %v710
        %v712 = vmul.f32 %v692, %v707
        %v713 = vmul.f32 %v692, %v711
        %v714 = vadd.f32 %v688, %v712
        %v715 = vadd.f32 %v689, %v713
        %716 = vset.pattern.permute.xlu0 2
        %717 = vperm.xlu0 %716, %v655
        %v718 = vpop.permute.xlu0 %717
        %v720 = vlaneseq
        %v721 = vshrl.u32 %v720, 7
        %v722 = vsub.s32 2, %v721
        %v723 = vrot.slane %v654, %v722
        %v724 = vlaneseq
        %v725 = vshrl.u32 %v724, 7
        %v726 = vsub.s32 6, %v725
        %v727 = vrot.slane %v654, %v726
        %v730 = vlaneseq
        %v731 = vshrl.u32 %v730, 7
        %v732 = vsub.s32 2, %v731
        %v733 = vrot.slane %v723, %v732
        %v734 = vlaneseq
        %v735 = vshrl.u32 %v734, 7
        %v736 = vsub.s32 2, %v735
        %v737 = vrot.slane %v727, %v736
        %v738 = vmul.f32 %v718, %v733
        %v739 = vmul.f32 %v718, %v737
        %v740 = vadd.f32 %v714, %v738
        %v741 = vadd.f32 %v715, %v739
        %742 = vset.pattern.permute.xlu0 3
        %743 = vperm.xlu0 %742, %v655
        %v744 = vpop.permute.xlu0 %743
        %v746 = vlaneseq
        %v747 = vshrl.u32 %v746, 7
        %v748 = vsub.s32 3, %v747
        %v749 = vrot.slane %v654, %v748
        %v750 = vlaneseq
        %v751 = vshrl.u32 %v750, 7
        %v752 = vsub.s32 7, %v751
        %v753 = vrot.slane %v654, %v752
        %v756 = vlaneseq
        %v757 = vshrl.u32 %v756, 7
        %v758 = vsub.s32 3, %v757
        %v759 = vrot.slane %v749, %v758
        %v760 = vlaneseq
        %v761 = vshrl.u32 %v760, 7
        %v762 = vsub.s32 3, %v761
        %v763 = vrot.slane %v753, %v762
        %v764 = vmul.f32 %v744, %v759
        %v765 = vmul.f32 %v744, %v763
        %v766 = vadd.f32 %v740, %v764
        %v767 = vadd.f32 %v741, %v765
        %v768 = vld [vmem:[%s8] sm:$0xf]
        %v769 = vld [vmem:[%s9] sm:$0xf]
        %v770 = vsel %vm604, %v766, 0.0
        %v771 = vsel %vm604, %v767, 0.0
        %v772 = vadd.f32 %v770, %v771
        %773 = vadd.xlane.f32.xlu0 %v772
        %v774 = vpop.xlane.xlu0 %773
        %v775 = vsel %vm604, %v774, 0.0
        %v776 = vrot.slane %v775, 4
        %v777 = vadd.f32 %v775, %v776
        %v778 = vrot.slane %v777, 2
        %v779 = vadd.f32 %v777, %v778
        %v780 = vrot.slane %v779, 1
        %v781 = vadd.f32 %v779, %v780
        %v782 = vmul.f32 %v781, 0.0009765625
        %v783 = vsub.f32 %v766, %v782
        %v784 = vsub.f32 %v767, %v782
        %v785 = vmul.f32 %v783, %v783
        %v786 = vmul.f32 %v784, %v784
        %v787 = vsel %vm604, %v785, 0.0
        %v788 = vsel %vm604, %v786, 0.0
        %v789 = vadd.f32 %v787, %v788
        %790 = vadd.xlane.f32.xlu0 %v789
        %v791 = vpop.xlane.xlu0 %790
        %v792 = vsel %vm604, %v791, 0.0
        %v793 = vrot.slane %v792, 4
        %v794 = vadd.f32 %v792, %v793
        %v795 = vrot.slane %v794, 2
        %v796 = vadd.f32 %v794, %v795
        %v797 = vrot.slane %v796, 1
        %v798 = vadd.f32 %v796, %v797
        %v799 = vmul.f32 %v798, 0.0009765625
        %v800 = vadd.f32 %v799, 1e-05
        %v801 = vrsqrt.pop %v800
        %v802 = vmul.f32 %v801, %v768
        %v803 = vmul.f32 %v782, %v802
        %v804 = vsub.f32 %v769, %v803
        %806 = vset.pattern.permute.xlu0 0
        %807 = vperm.xlu0 %806, %v802
        %v808 = vpop.permute.xlu0 %807
        %v810 = vmul.f32 %v766, %v808
        %v811 = vmul.f32 %v767, %v808
        %813 = vset.pattern.permute.xlu0 0
        %814 = vperm.xlu0 %813, %v804
        %v815 = vpop.permute.xlu0 %814
        %v817 = vadd.f32 %v810, %v815
        %v818 = vadd.f32 %v811, %v815
        %v819 = vadd.f32 %v652, %v817
        %v820 = vadd.f32 %v653, %v818
        %v821 = vxor.u32 %v819, 2147483648
        %v822 = vxor.u32 %v820, 2147483648
        %v823 = vmul.f32 %v821, 1.442695
        %v824 = vpow.pop %v823
        %v825 = vmul.f32 %v822, 1.442695
        %v826 = vpow.pop %v825
        %v827 = vadd.f32 %v824, 1.0
        %v828 = vadd.f32 %v826, 1.0
        %v829 = vrcp.pop %v827
        %v830 = vmul.f32 1.0, %v829
        %v831 = vrcp.pop %v828
        %v832 = vmul.f32 1.0, %v831
        %v833 = vmul.f32 %v819, %v830
        %v834 = vmul.f32 %v820, %v832
        %v835 = vld [vmem:[%s10] sm:$0xf]
        %v836 = vld [vmem:[%s11] sm:$0xf]
        %v837 = vsel %vm604, %v833, 0.0
        %v838 = vsel %vm604, %v834, 0.0
        %v839 = vadd.f32 %v837, %v838
        %840 = vadd.xlane.f32.xlu0 %v839
        %v841 = vpop.xlane.xlu0 %840
        %v842 = vsel %vm604, %v841, 0.0
        %v843 = vrot.slane %v842, 4
        %v844 = vadd.f32 %v842, %v843
        %v845 = vrot.slane %v844, 2
        %v846 = vadd.f32 %v844, %v845
        %v847 = vrot.slane %v846, 1
        %v848 = vadd.f32 %v846, %v847
        %v849 = vmul.f32 %v848, 0.0009765625
        %v850 = vsub.f32 %v833, %v849
        %v851 = vsub.f32 %v834, %v849
        %v852 = vmul.f32 %v850, %v850
        %v853 = vmul.f32 %v851, %v851
        %v854 = vsel %vm604, %v852, 0.0
        %v855 = vsel %vm604, %v853, 0.0
        %v856 = vadd.f32 %v854, %v855
        %857 = vadd.xlane.f32.xlu0 %v856
        %v858 = vpop.xlane.xlu0 %857
        %v859 = vsel %vm604, %v858, 0.0
        %v860 = vrot.slane %v859, 4
        %v861 = vadd.f32 %v859, %v860
        %v862 = vrot.slane %v861, 2
        %v863 = vadd.f32 %v861, %v862
        %v864 = vrot.slane %v863, 1
        %v865 = vadd.f32 %v863, %v864
        %v866 = vmul.f32 %v865, 0.0009765625
        %v867 = vadd.f32 %v866, 1e-05
        %v868 = vrsqrt.pop %v867
        %v869 = vmul.f32 %v868, %v835
        %v870 = vmul.f32 %v849, %v869
        %v871 = vsub.f32 %v836, %v870
        %v872 = vld [vmem:[%s12] sm:$0xf]
        %v873 = vld [vmem:[#allocation2] sm:$0x1]
        %v874 = vmul.f32 %v872, %v869
        %v875 = vmul.f32 %v872, %v871
        %vm876 = vcmask 3072
        %v877 = vsel %vm876, %v875, 0.0
        %v878 = vrot.slane %v877, 4
        %v879 = vadd.f32 %v877, %v878
        %v880 = vrot.slane %v879, 2
        %v881 = vadd.f32 %v879, %v880
        %v882 = vrot.slane %v881, 1
        %v883 = vadd.f32 %v881, %v882
        %v884 = vadd.f32 %v883, %v873
        %886 = vset.pattern.permute.xlu0 0
        %887 = vperm.xlu0 %886, %v874
        %v888 = vpop.permute.xlu0 %887
        %v890 = vmul.f32 %v888, %v833
        %v891 = vmul.f32 %v888, %v834
        %v892 = vsel %vm604, %v890, 0.0
        %v893 = vrot.slane %v892, 4
        %v894 = vadd.f32 %v892, %v893
        %v895 = vrot.slane %v894, 2
        %v896 = vadd.f32 %v894, %v895
        %v897 = vrot.slane %v896, 1
        %v898 = vadd.f32 %v896, %v897
        %v899 = vsel %vm604, %v891, 0.0
        %v900 = vrot.slane %v899, 4
        %v901 = vadd.f32 %v899, %v900
        %v902 = vrot.slane %v901, 2
        %v903 = vadd.f32 %v901, %v902
        %v904 = vrot.slane %v903, 1
        %v905 = vadd.f32 %v903, %v904
        %907 = vset.pattern.permute.xlu0 0
        %908 = vperm.xlu0 %907, %v884
        %v909 = vpop.permute.xlu0 %908
        %v911 = vadd.f32 %v898, %v909
        %v912 = vadd.f32 %v905, %v909
        %v913 = vxor.u32 %v911, 2147483648
        %v914 = vxor.u32 %v912, 2147483648
        %v915 = vmul.f32 %v913, 1.442695
        %v916 = vpow.pop %v915
        %v917 = vmul.f32 %v914, 1.442695
        %v918 = vpow.pop %v917
        %v919 = vadd.f32 %v916, 1.0
        %v920 = vadd.f32 %v918, 1.0
        %v921 = vrcp.pop %v919
        %v922 = vmul.f32 1.0, %v921
        %v923 = vrcp.pop %v920
        %v924 = vmul.f32 1.0, %v923
        %v925 = vmul.f32 %v911, %v922
        %v926 = vmul.f32 %v912, %v924
        %v927 = vlaneseq
        %v928 = vshrl.u32 %v927, 7
        %v929 = vsub.s32 0, %v928
        %v930 = vrot.slane %v925, %v929
        %v931 = vlaneseq
        %v932 = vshrl.u32 %v931, 7
        %v933 = vsub.s32 0, %v932
        %v934 = vrot.slane %v926, %v933
        %v937 = vcombine.low %v930, %v934
        %v939 = vmul.f32 %v654, %v937
        %940 = vst [vmem:[%s477] sm:$0xff] %v939
        %s941 = sand.u32 %s342, 1
        %s942 = scalar_lea.sflag [#allocation4], %s941
        %s943 = sand.u32 %s342, 1
        %s944 = smul.addr %s943, 8
        %s945 = scalar_lea.vmem [#allocation3], %s944
        // Predicated region
        $region77: #{tpu_custom_call.1} parent=75 // pred_check
          %p946 = pneg %p352
        $region78: #{tpu_custom_call.1} parent=75 // pred_check_branch
          %948 = sbr.rel (%p946) target = $region80
        $region79: #{tpu_custom_call.1} parent=75 // pred_region
          %s950 = ssub.s32 128, 128
          %951 = vsyncadd %s942, %s950
          %s952 = smul.addr %s30, 2
          %s953 = smul.addr %s952, 64
          %s954 = scalar_lea.hbm %s14, %s953
          %s956 = sshll.u32 %s945, 4
          %s957 = int_to_ptr.vmem [resolvable:$true] %s956
          %959 = dma.vmem_to_hbm [thread:$0]  %s957, 128, %s954, %s942
        $region80: #{tpu_custom_call.1} parent=75 // pred_fallthru
          _
      $region76: #{tpu_custom_call.1} parent=5 // pred_fallthru
        _
      %p960 = scmp.le.s32.totalorder 2, %s25
      // Predicated region
      $region81: #{tpu_custom_call.1} parent=5 // pred_check
        %p961 = pneg %p960
      $region82: #{tpu_custom_call.1} parent=5 // pred_check_branch
        %963 = sbr.rel (%p961) target = $region84
      $region83: #{tpu_custom_call.1} parent=5 // pred_region
        %s964 = ssub.s32 %s25, 2
        // Predicated region
        $region85: #{tpu_custom_call.1} parent=83 // pred_check
          %p965 = pneg %p358
        $region86: #{tpu_custom_call.1} parent=83 // pred_check_branch
          %967 = sbr.rel (%p965) target = $region88
        $region87: #{tpu_custom_call.1} parent=83 // pred_region
          %s968 = sand.u32 %s343, 1
          %s969 = scalar_lea.sflag [#allocation4], %s968
          %s970 = sand.u32 %s343, 1
          %s971 = smul.addr %s970, 8
          %s972 = scalar_lea.vmem [#allocation3], %s971
          %973 = dma.done %s969, 128
        $region88: #{tpu_custom_call.1} parent=83 // pred_fallthru
          _
      $region84: #{tpu_custom_call.1} parent=5 // pred_fallthru
        _
    $region6: #{tpu_custom_call.1} parent=1 // loop_footer
      %s29 = sadd.s32 1, %s25
    $region7: #{tpu_custom_call.1} parent=1 // loop_footer_branch
      %24 = sbr.rel target = $region3
    $region8: #{tpu_custom_call.1} parent=1 // loop_exit
      _
    %974 = vsyncpa [#allocation4], 1
    %s975 = scalar_lea.sflag [#allocation4], 1
    %976 = vsyncpa %s975, 1

</llo_original>
